<compile_context>
chip_gen: v5e
topology: v5e:2x2
jax: 0.10.0
libtpu: 0.0.40
codegen_flags: <defaults>
</compile_context>

<pallas_src>
import jax
import jax.numpy as jnp
from jax.experimental import pallas as pl
from jax.experimental.pallas import tpu as pltpu


def _folded_affine_kernel(xT_ref, w_ref, b_ref, o_ref):
    # xT_ref: (F, TB)  features on sublanes, batch on lanes
    # w_ref : (F, 1)   folded weight column
    # b_ref : (1, 1)   folded bias scalar
    # o_ref : (1, TB)  lane-dense output slab
    x = xT_ref[...]                                   # (F, TB)
    w = w_ref[...]                                    # (F, 1) -> broadcast over lanes
    acc = jnp.sum(x * w, axis=0, keepdims=True)       # (1, TB)  VPU mul + sublane reduce
    o_ref[...] = acc + b_ref[...]                     # bias broadcast over lanes


def _fold_params(params):
    """Fold torch-style (W:(out,in), b:(out,)) layers into one affine map."""
    A = None
    c = None
    for W, b in params:
        Wt = W.T.astype(jnp.float32)                  # (in, out)
        bb = b.reshape(1, -1).astype(jnp.float32)     # (1, out)
        if A is None:
            A, c = Wt, bb
        else:
            A = A @ Wt
            c = c @ Wt + bb
    return A, c                                       # (F_in, 1), (1, 1)


def logistic_dnn_forward(x, params, *, tb=512):
    """x: (B, 5) float32. params: list of (W, b), torch nn.Linear layout.

    Returns (B, 1) float32, identical semantics to the 5-layer forward pass.
    """
    B, F = x.shape
    w_fold, b_fold = _fold_params(params)             # (F, 1), (1, 1)

    # Batch on the lane axis, padded to a multiple of the lane-tile size.
    tb_eff = max(128, (min(tb, ((B + 127) // 128) * 128) // 128) * 128)
    B_pad = ((B + tb_eff - 1) // tb_eff) * tb_eff
    xT = jnp.pad(x.T.astype(jnp.float32), ((0, 0), (0, B_pad - B)))  # (F, B_pad)

    grid = (B_pad // tb_eff,)
    outT = pl.pallas_call(
        _folded_affine_kernel,
        out_shape=jax.ShapeDtypeStruct((1, B_pad), jnp.float32),
        grid=grid,
        in_specs=[
            pl.BlockSpec((F, tb_eff), lambda i: (0, i)),   # batch tile, lane-dense
            pl.BlockSpec((F, 1), lambda i: (0, 0)),        # weights VMEM-resident
            pl.BlockSpec((1, 1), lambda i: (0, 0)),        # bias VMEM-resident
        ],
        out_specs=pl.BlockSpec((1, tb_eff), lambda i: (0, i)),
        compiler_params=pltpu.CompilerParams(
            dimension_semantics=("parallel",)),            # megacore split on v7x
    )(xT, w_fold, b_fold)

    return outT[:, :B].T                                   # (B, 1)


def init_params(key):
    """torch.nn.Linear-style init: W (out, in), b (out,), uniform +-1/sqrt(fan_in)."""
    dims = [5, 60, 20, 10, 5, 1]
    params = []
    for i in range(len(dims) - 1):
        fan_in, fan_out = dims[i], dims[i + 1]
        key, kw, kb = jax.random.split(key, 3)
        bound = 1.0 / jnp.sqrt(jnp.float32(fan_in))
        w = jax.random.uniform(kw, (fan_out, fan_in), jnp.float32, -bound, bound)
        b = jax.random.uniform(kb, (fan_out,), jnp.float32, -bound, bound)
        params.append((w, b))
    return params


def reference_forward(x, params):
    h = x
    for w, b in params:
        h = h @ w.T + b
    return h


if __name__ == "__main__":
    key = jax.random.PRNGKey(0)
    kx, kp, kx2 = jax.random.split(key, 3)
    params = init_params(kp)

    # Matches the original script's scale (n1 = 200 samples of dim 5);
    # exercises the padded-tail path (200 -> 256 lanes).
    B = 200
    x = jax.random.normal(kx, (B, 5), jnp.float32)
    out = jax.block_until_ready(logistic_dnn_forward(x, params))
    ref = reference_forward(x, params)
    assert out.shape == (B, 1)
    assert jnp.allclose(out, ref, atol=1e-4, rtol=1e-4)

    # Larger batch: multi-tile grid (pipelined, parallel axis) + padding.
    B2 = 1100
    x2 = jax.random.normal(kx2, (B2, 5), jnp.float32)
    out2 = jax.block_until_ready(logistic_dnn_forward(x2, params, tb=256))
    ref2 = reference_forward(x2, params)
    assert out2.shape == (B2, 1)
    assert jnp.allclose(out2, ref2, atol=1e-4, rtol=1e-4)

    print("KERNEL_OK")
</pallas_src>

<mosaic_0001>
module attributes {stable_mosaic.version = 11 : i64} {
  func.func @_folded_affine_kernel(%arg0: i32, %arg1: memref<5x256xf32, #tpu.memory_space<vmem>>, %arg2: memref<5x1xf32, #tpu.memory_space<vmem>>, %arg3: memref<1x1xf32, #tpu.memory_space<vmem>>, %arg4: memref<1x256xf32, #tpu.memory_space<vmem>>) attributes {dimension_semantics = [#tpu.dimension_semantics<parallel>], iteration_bounds = array<i64: 1>, scalar_prefetch = 0 : i64, scratch_operands = 0 : i64, tpu.core_type = #tpu.core_type<tc>, window_params = [{transform_indices = @transform_0, window_bounds = array<i64: 5, 256>}, {pipeline_mode = #tpu.pipeline_mode<synchronous>, transform_indices = @transform_1, window_bounds = array<i64: 5, 1>}, {pipeline_mode = #tpu.pipeline_mode<synchronous>, transform_indices = @transform_2, window_bounds = array<i64: 1, 1>}, {transform_indices = @transform_3, window_bounds = array<i64: 1, 256>}]} {
    %c0 = arith.constant 0 : index
    %c0_0 = arith.constant 0 : index
    %0 = vector.load %arg1[%c0, %c0_0] : memref<5x256xf32, #tpu.memory_space<vmem>>, vector<5x256xf32>
    %c0_1 = arith.constant 0 : index
    %c0_2 = arith.constant 0 : index
    %1 = vector.load %arg2[%c0_1, %c0_2] : memref<5x1xf32, #tpu.memory_space<vmem>>, vector<5x1xf32>
    %2 = vector.broadcast %1 : vector<5x1xf32> to vector<5x256xf32>
    %3 = arith.mulf %0, %2 : vector<5x256xf32>
    %cst = arith.constant dense<0.000000e+00> : vector<256xf32>
    %4 = vector.multi_reduction <add>, %3, %cst [0] : vector<5x256xf32> to vector<256xf32>
    %5 = vector.shape_cast %4 : vector<256xf32> to vector<1x256xf32>
    %c0_3 = arith.constant 0 : index
    %c0_4 = arith.constant 0 : index
    %6 = vector.load %arg3[%c0_3, %c0_4] : memref<1x1xf32, #tpu.memory_space<vmem>>, vector<1x1xf32>
    %7 = vector.broadcast %6 : vector<1x1xf32> to vector<1x256xf32>
    %8 = arith.addf %5, %7 : vector<1x256xf32>
    %c0_5 = arith.constant 0 : index
    %c0_6 = arith.constant 0 : index
    %9 = vector.load %arg4[%c0_5, %c0_6] : memref<1x256xf32, #tpu.memory_space<vmem>>, vector<1x256xf32>
    tpu.vector_store %arg4[%c0_5, %c0_6], %8 {strides = array<i32>} : memref<1x256xf32, #tpu.memory_space<vmem>>, vector<1x256xf32>,
    return
  }
  func.func @transform_0(%arg0: i32) -> (i32, i32) {
    %c0_i32 = arith.constant 0 : i32
    %c0_i32_0 = arith.constant 0 : i32
    return %c0_i32, %arg0 : i32, i32
  }
  func.func @transform_1(%arg0: i32) -> (i32, i32) {
    %c0_i32 = arith.constant 0 : i32
    %c0_i32_0 = arith.constant 0 : i32
    %c0_i32_1 = arith.constant 0 : i32
    return %c0_i32, %c0_i32_0 : i32, i32
  }
  func.func @transform_2(%arg0: i32) -> (i32, i32) {
    %c0_i32 = arith.constant 0 : i32
    %c0_i32_0 = arith.constant 0 : i32
    %c0_i32_1 = arith.constant 0 : i32
    return %c0_i32, %c0_i32_0 : i32, i32
  }
  func.func @transform_3(%arg0: i32) -> (i32, i32) {
    %c0_i32 = arith.constant 0 : i32
    %c0_i32_0 = arith.constant 0 : i32
    return %c0_i32, %arg0 : i32, i32
  }
}

</mosaic_0001>

<llo_original>
// kernel: tpu_custom_call.1
$region0: #{tpu_custom_call.1}
  #allocation0 [shape = 'u32[]', space=smem, size = 0x4, offset = 0x4, fixed_abs, tag = 'smem constant byte address 0x4 - core index']
  #allocation1 [shape = 'u32[72,128]{1,0:T(1,128)}', space=vmem, size = 0x9000, scoped, tag = 'internal scratch']
  #allocation2 [shape = 'f32[1,1]{1,0:T(1,128)S(1)}', space=vmem, size = 0x200, scoped, tag = 'scoped memory for tpu_custom_call.1']
  %s0 = inlined_call_operand.hbm [shape: f32[5,256], index: 0, kind: input, shape index: {}]
  %s1 = inlined_call_operand.vmem [shape: f32[5,1], index: 1, kind: input, shape index: {}]
  %s2 = inlined_call_operand.<no memory space> [shape: f32[1,1], index: 2, kind: input, shape index: {}]
  %s3 = inlined_call_operand.hbm [shape: f32[1,256], index: 3, kind: output, shape index: {}]
  %s4 = sld [smem:[#allocation0]]
  $region26: #{tpu_custom_call.1} parent=0
    _
  %s6 = ssub.s32 1, %s4
  %s7 = scalar_select 0, %s6, %s4
  %v8 = vstv %s2
  %9 = vst [vmem:[#allocation2] sm:$0x1] %v8
  $region1: #{tpu_custom_call.1} parent=0
    #allocation3 [shape = 'u8[8192]{0}', space=vmem, size = 0x2000, scoped, tag = 'input window, operand 0, single buffered']
    #allocation4 [shape = 's32[1]{0}', space=sflag, size = 0x4, scoped, tag = 'scoped memory for tpu_custom_call.1']
    #allocation5 [shape = 's32[1]{0}', space=sflag, size = 0x4, scoped, tag = 'scoped memory for tpu_custom_call.1']
    #allocation6 [shape = 'u8[1024]{0}', space=vmem, size = 0x400, scoped, tag = 'output window, operand 0, single buffered']
    %10 = vsyncpa [#allocation4], 0
    %11 = vsyncpa [#allocation5], 0
    // Predicated region
    $region2: #{tpu_custom_call.1} parent=1 // pred_check
      _
    $region3: #{tpu_custom_call.1} parent=1 // pred_check_branch
      %13 = sbr.rel (0) target = $region5
    $region4: #{tpu_custom_call.1} parent=1 // pred_region
      %15 = vsyncadd [#allocation4], 0
      %s17 = sshll.u32 %s0, 4
      %s18 = int_to_ptr.hbm [resolvable:$true] %s17
      %s19 = sshll.u32 [#allocation3], 4
      %s20 = int_to_ptr.vmem [resolvable:$true] %s19
      %22 = dma.hbm_to_vmem [thread:$0]  %s18, 256, %s20, [#allocation4]
    $region5: #{tpu_custom_call.1} parent=1 // pred_fallthru
      _
    // Predicated region
    $region6: #{tpu_custom_call.1} parent=1 // pred_check
      _
    $region7: #{tpu_custom_call.1} parent=1 // pred_check_branch
      %24 = sbr.rel (0) target = $region9
    $region8: #{tpu_custom_call.1} parent=1 // pred_region
      _
    $region9: #{tpu_custom_call.1} parent=1 // pred_fallthru
      _
    // Predicated region
    $region10: #{tpu_custom_call.1} parent=1 // pred_check
      _
    $region11: #{tpu_custom_call.1} parent=1 // pred_check_branch
      %26 = sbr.rel (0) target = $region13
    $region12: #{tpu_custom_call.1} parent=1 // pred_region
      _
    $region13: #{tpu_custom_call.1} parent=1 // pred_fallthru
      _
    // Predicated region
    $region14: #{tpu_custom_call.1} parent=1 // pred_check
      _
    $region15: #{tpu_custom_call.1} parent=1 // pred_check_branch
      %28 = sbr.rel (0) target = $region17
    $region16: #{tpu_custom_call.1} parent=1 // pred_region
      %30 = dma.done [#allocation4], 256
    $region17: #{tpu_custom_call.1} parent=1 // pred_fallthru
      _
    %v31 = vld [vmem:[#allocation3] sm:$0x1f]
    %v32 = vld [vmem:[#allocation3 + $0x8] sm:$0x1f]
    %v33 = vld [vmem:[%s1] sm:$0x1f]
    %35 = vset.pattern.permute.xlu0 0
    %36 = vperm.xlu0 %35, %v33
    %v37 = vpop.permute.xlu0 %36
    %v39 = vmul.f32 %v31, %v37
    %v40 = vmul.f32 %v32, %v37
    %vm41 = vcmask 1044480
    %v42 = vsel %vm41, %v39, 0.0
    %v43 = vrot.slane %v42, 4
    %v44 = vadd.f32 %v42, %v43
    %v45 = vrot.slane %v44, 2
    %v46 = vadd.f32 %v44, %v45
    %v47 = vrot.slane %v46, 1
    %v48 = vadd.f32 %v46, %v47
    %v49 = vsel %vm41, %v40, 0.0
    %v50 = vrot.slane %v49, 4
    %v51 = vadd.f32 %v49, %v50
    %v52 = vrot.slane %v51, 2
    %v53 = vadd.f32 %v51, %v52
    %v54 = vrot.slane %v53, 1
    %v55 = vadd.f32 %v53, %v54
    %v56 = vld [vmem:[#allocation2] sm:$0x1]
    %58 = vset.pattern.permute.xlu0 0
    %59 = vperm.xlu0 %58, %v56
    %v60 = vpop.permute.xlu0 %59
    %v62 = vperm.slane %v60, 0
    %v63 = vadd.f32 %v48, %v62
    %v64 = vadd.f32 %v55, %v62
    %v67 = vrot.slane %v64, 7
    %vm68 = vcmask 1040384
    %v69 = vsel %vm68, %v63, %v67
    %v71 = vlaneseq
    %vm72 = vcmp.ge.s32.totalorder %v71, 0
    %vm73 = vcmp.lt.s32.totalorder %v71, 256
    %vm74 = vmand %vm72, %vm73
    %75 = vst.msk [vmem:[#allocation6] sm:$0x3] %vm74, %v69
    // Predicated region
    $region18: #{tpu_custom_call.1} parent=1 // pred_check
      _
    $region19: #{tpu_custom_call.1} parent=1 // pred_check_branch
      %77 = sbr.rel (0) target = $region21
    $region20: #{tpu_custom_call.1} parent=1 // pred_region
      %79 = vsyncadd [#allocation5], 0
      %s81 = sshll.u32 [#allocation6], 4
      %s82 = int_to_ptr.vmem [resolvable:$true] %s81
      %s83 = sshll.u32 %s3, 4
      %s84 = int_to_ptr.hbm [resolvable:$true] %s83
      %86 = dma.vmem_to_hbm [thread:$0]  %s82, 32, %s84, [#allocation5]
    $region21: #{tpu_custom_call.1} parent=1 // pred_fallthru
      _
    // Predicated region
    $region22: #{tpu_custom_call.1} parent=1 // pred_check
      _
    $region23: #{tpu_custom_call.1} parent=1 // pred_check_branch
      %88 = sbr.rel (0) target = $region25
    $region24: #{tpu_custom_call.1} parent=1 // pred_region
      %90 = dma.done [#allocation5], 32
    $region25: #{tpu_custom_call.1} parent=1 // pred_fallthru
      _
    %91 = vsyncpa [#allocation4], 1
    %92 = vsyncpa [#allocation5], 1

</llo_original>
